<compile_context>
chip_gen: v5e
topology: v5e:2x2
jax: 0.10.0
libtpu: 0.0.40
codegen_flags: <defaults>
</compile_context>

<pallas_src>
import functools

import jax
import jax.numpy as jnp
from jax.experimental import pallas as pl
from jax.experimental.pallas import tpu as pltpu


def _mha_flash_kernel(heads, x_q_ref, x_kv_ref, wq_ref, wkv_ref, wu_ref,
                      bias_ref, out_ref, q_buf, acc_buf, m_buf, l_buf):
    """One grid step = one (batch, q-tile, kv-tile) triple.

    x_q_ref  : (1, tq, k)   query-side rows of x
    x_kv_ref : (1, tkv, k)  key/value-side rows of x
    wq_ref   : (k, k)       Wq^T pre-scaled by 1/sqrt(k)
    wkv_ref  : (k, 2k)      fused [Wk; Wv]^T
    wu_ref   : (k, k)       unify weight transposed (y = o @ wu_t + b)
    bias_ref : (1, k)       unify bias (f32)
    out_ref  : (1, tq, k)
    q_buf    : (tq, k)      x.dtype  projected queries, resident over kv axis
    acc_buf  : (tq, k)      f32      unnormalised output accumulator
    m_buf    : (tq, heads)  f32      running row-max per head
    l_buf    : (tq, heads)  f32      running softmax denominator per head
    """
    ki = pl.program_id(2)
    tq, k = q_buf.shape
    s = k // heads

    @pl.when(ki == 0)
    def _():
        # Project queries for this q tile (scale already folded into wq_ref),
        # drop straight back to the input dtype, reset online-softmax state.
        q = jnp.dot(x_q_ref[0], wq_ref[...], preferred_element_type=jnp.float32)
        q_buf[...] = q.astype(q_buf.dtype)
        m_buf[...] = jnp.full(m_buf.shape, -jnp.inf, dtype=m_buf.dtype)
        l_buf[...] = jnp.zeros(l_buf.shape, dtype=l_buf.dtype)
        acc_buf[...] = jnp.zeros(acc_buf.shape, dtype=acc_buf.dtype)

    # Fused K/V projection for this kv tile (all heads, one MXU matmul); cast
    # back to the input dtype immediately so the score/PV matmuls run at full
    # MXU rate and the live activation slab is half the size.
    kv = jnp.dot(x_kv_ref[0], wkv_ref[...],
                 preferred_element_type=jnp.float32).astype(x_kv_ref.dtype)   # (tkv, 2k)

    # Per-head online-softmax update. `heads` is a Python int -> unrolled at
    # trace time; every slice is static and lane-contiguous, and each head's
    # partial result is written straight into the VMEM scratch slab.
    for h in range(heads):
        q_h = q_buf[:, h * s:(h + 1) * s]                      # (tq, s)  x.dtype
        k_h = kv[:, h * s:(h + 1) * s]                         # (tkv, s) x.dtype
        v_h = kv[:, k + h * s:k + (h + 1) * s]                 # (tkv, s) x.dtype

        logits = jnp.einsum('qd,kd->qk', q_h, k_h,
                            preferred_element_type=jnp.float32)       # (tq, tkv) f32

        m_old = m_buf[:, h:h + 1]                              # (tq, 1)
        m_new = jnp.maximum(m_old, jnp.max(logits, axis=-1, keepdims=True))
        alpha = jnp.exp(m_old - m_new)                         # (tq, 1)
        p = jnp.exp(logits - m_new)                            # (tq, tkv) f32, unnormalised

        l_buf[:, h:h + 1] = alpha * l_buf[:, h:h + 1] + jnp.sum(
            p, axis=-1, keepdims=True)
        pv = jnp.dot(p.astype(v_h.dtype), v_h,
                     preferred_element_type=jnp.float32)       # (tq, s) f32
        acc_buf[:, h * s:(h + 1) * s] = alpha * acc_buf[:, h * s:(h + 1) * s] + pv
        m_buf[:, h:h + 1] = m_new

    @pl.when(ki == pl.num_programs(2) - 1)
    def _():
        # Deferred softmax normalisation on the (tq, s) accumulators (EUP
        # approximate reciprocal), then the unify projection + bias.
        inv_l = pl.reciprocal(l_buf[...], approx=True)         # (tq, heads)
        for h in range(heads):
            acc_buf[:, h * s:(h + 1) * s] = (
                acc_buf[:, h * s:(h + 1) * s] * inv_l[:, h:h + 1])
        o = acc_buf[...].astype(wu_ref.dtype)                  # (tq, k) head-major channels
        y = jnp.dot(o, wu_ref[...], preferred_element_type=jnp.float32)
        y = y + bias_ref[...].astype(jnp.float32)
        out_ref[0] = y.astype(out_ref.dtype)


def _pick_tile(t, target):
    """Largest multiple-of-8 divisor of t that is <= target (or t itself)."""
    if t <= target:
        return t
    cand = (target // 8) * 8
    while cand >= 8:
        if t % cand == 0:
            return cand
        cand -= 8
    return t


def multihead_self_attention(x, params, heads, *, q_tile=256, kv_tile=512):
    """Pallas forward matching MultiheadSelfAttention.forward.

    q_tile/kv_tile defaults target v7x (64 MiB VMEM, 256-wide MXU); use
    ~2x larger tiles on v6e (128 MiB VMEM) and 128/256 on v5e.
    """
    b, t, k = x.shape
    assert k % heads == 0, "k must be divisible by heads"
    wq, wk, wv, wu, bu = params   # (k, k) nn.Linear weights; bu: (k,)

    # Fold 1/sqrt(k) into Wq once (trace time); fuse Wk/Wv into one matmul.
    scale = 1.0 / (k ** 0.5)
    wq_t = (wq.T * scale).astype(x.dtype)                            # (k, k)
    wkv_t = jnp.concatenate([wk, wv], axis=0).T.astype(x.dtype)      # (k, 2k)
    wu_t = wu.T.astype(x.dtype)                                      # (k, k)
    bias2d = bu.reshape(1, k).astype(jnp.float32)

    tq = _pick_tile(t, q_tile)
    tkv = _pick_tile(t, kv_tile)
    nq = t // tq
    nkv = t // tkv

    kernel = functools.partial(_mha_flash_kernel, heads)

    return pl.pallas_call(
        kernel,
        out_shape=jax.ShapeDtypeStruct((b, t, k), x.dtype),
        grid_spec=pltpu.PrefetchScalarGridSpec(
            num_scalar_prefetch=0,
            grid=(b, nq, nkv),
            in_specs=[
                pl.BlockSpec((1, tq, k), lambda bi, qi, ki: (bi, qi, 0)),   # x (q rows)
                pl.BlockSpec((1, tkv, k), lambda bi, qi, ki: (bi, ki, 0)),  # x (kv rows)
                pl.BlockSpec((k, k), lambda bi, qi, ki: (0, 0)),            # Wq^T * scale
                pl.BlockSpec((k, 2 * k), lambda bi, qi, ki: (0, 0)),        # [Wk;Wv]^T
                pl.BlockSpec((k, k), lambda bi, qi, ki: (0, 0)),            # Wu^T
                pl.BlockSpec((1, k), lambda bi, qi, ki: (0, 0)),            # unify bias
            ],
            out_specs=pl.BlockSpec((1, tq, k), lambda bi, qi, ki: (bi, qi, 0)),
            scratch_shapes=[
                pltpu.VMEM((tq, k), x.dtype),          # q_buf
                pltpu.VMEM((tq, k), jnp.float32),      # acc_buf
                pltpu.VMEM((tq, heads), jnp.float32),  # m_buf
                pltpu.VMEM((tq, heads), jnp.float32),  # l_buf
            ],
        ),
        compiler_params=pltpu.CompilerParams(
            dimension_semantics=("parallel", "parallel", "arbitrary"),
            vmem_limit_bytes=64 * 1024 * 1024,
        ),
    )(x, x, wq_t, wkv_t, wu_t, bias2d)


def reference(x, params, heads):
    """Pure-JAX replica of the PyTorch forward, used only for verification."""
    b, t, k = x.shape
    s = k // heads
    wq, wk, wv, wu, bu = params
    q = x @ wq.T
    ke = x @ wk.T
    v = x @ wv.T

    def split(z):
        return z.reshape(b, t, heads, s).transpose(0, 2, 1, 3).reshape(b * heads, t, s)

    q, ke, v = split(q), split(ke), split(v)
    dot = jnp.einsum('bqd,bkd->bqk', q, ke) / (k ** 0.5)
    p = jax.nn.softmax(dot, axis=-1)
    out = jnp.einsum('bqk,bks->bqs', p, v)
    out = out.reshape(b, heads, t, s).transpose(0, 2, 1, 3).reshape(b, t, k)
    return out @ wu.T + bu


if __name__ == "__main__":
    # Small shapes consistent with the module: x is (batch, seq, k), k % heads == 0.
    b, t, k, heads = 2, 8, 32, 4

    key = jax.random.PRNGKey(0)
    kx, kq, kk_, kv, kwu, kb = jax.random.split(key, 6)

    x = jax.random.normal(kx, (b, t, k), dtype=jnp.float32)

    bnd = 1.0 / (k ** 0.5)   # nn.Linear default init bound (in_features = k)
    wq = jax.random.uniform(kq, (k, k), jnp.float32, -bnd, bnd)
    wk = jax.random.uniform(kk_, (k, k), jnp.float32, -bnd, bnd)
    wv = jax.random.uniform(kv, (k, k), jnp.float32, -bnd, bnd)
    wu = jax.random.uniform(kwu, (k, k), jnp.float32, -bnd, bnd)
    bu = jax.random.uniform(kb, (k,), jnp.float32, -bnd, bnd)
    params = (wq, wk, wv, wu, bu)

    out = multihead_self_attention(x, params, heads)
    out = jax.block_until_ready(out)

    ref = reference(x, params, heads)
    assert out.shape == (b, t, k)
    # 5e-3 tolerance: the softmax denominator uses the EUP approximate
    # reciprocal; everything else is f32-exact at these (f32-input) shapes.
    assert jnp.allclose(out, ref, atol=5e-3, rtol=5e-3), "mismatch vs pure-JAX reference"

    print("KERNEL_OK")
</pallas_src>

<mosaic_0001>
module attributes {stable_mosaic.version = 11 : i64} {
  func.func @_mha_flash_kernel(%arg0: i32, %arg1: i32, %arg2: i32, %arg3: memref<1x8x32xf32, #tpu.memory_space<vmem>>, %arg4: memref<1x8x32xf32, #tpu.memory_space<vmem>>, %arg5: memref<32x32xf32, #tpu.memory_space<vmem>>, %arg6: memref<32x64xf32, #tpu.memory_space<vmem>>, %arg7: memref<32x32xf32, #tpu.memory_space<vmem>>, %arg8: memref<1x32xf32, #tpu.memory_space<vmem>>, %arg9: memref<1x8x32xf32, #tpu.memory_space<vmem>>, %arg10: memref<8x32xf32, #tpu.memory_space<vmem>>, %arg11: memref<8x32xf32, #tpu.memory_space<vmem>>, %arg12: memref<8x4xf32, #tpu.memory_space<vmem>>, %arg13: memref<8x4xf32, #tpu.memory_space<vmem>>) attributes {dimension_semantics = [#tpu.dimension_semantics<parallel>, #tpu.dimension_semantics<parallel>, #tpu.dimension_semantics<arbitrary>], iteration_bounds = array<i64: 2, 1, 1>, scalar_prefetch = 0 : i64, scratch_operands = 4 : i64, tpu.core_type = #tpu.core_type<tc>, window_params = [{transform_indices = @transform_0, window_bounds = array<i64: 1, 8, 32>}, {transform_indices = @transform_1, window_bounds = array<i64: 1, 8, 32>}, {pipeline_mode = #tpu.pipeline_mode<synchronous>, transform_indices = @transform_2, window_bounds = array<i64: 32, 32>}, {pipeline_mode = #tpu.pipeline_mode<synchronous>, transform_indices = @transform_3, window_bounds = array<i64: 32, 64>}, {pipeline_mode = #tpu.pipeline_mode<synchronous>, transform_indices = @transform_4, window_bounds = array<i64: 32, 32>}, {pipeline_mode = #tpu.pipeline_mode<synchronous>, transform_indices = @transform_5, window_bounds = array<i64: 1, 32>}, {transform_indices = @transform_6, window_bounds = array<i64: 1, 8, 32>}]} {
    %c0_i32 = arith.constant 0 : i32
    %0 = arith.cmpi eq, %arg2, %c0_i32 : i32
    %1 = arith.extui %0 : i1 to i32
    %c0_i32_0 = arith.constant 0 : i32
    %2 = arith.cmpi ne, %1, %c0_i32_0 : i32
    scf.if %2 {
      %c0_73 = arith.constant 0 : index
      %c0_74 = arith.constant 0 : index
      %c0_75 = arith.constant 0 : index
      %114 = vector.load %arg3[%c0_73, %c0_74, %c0_75] : memref<1x8x32xf32, #tpu.memory_space<vmem>>, vector<1x8x32xf32>
      %115 = vector.shape_cast %114 : vector<1x8x32xf32> to vector<8x32xf32>
      %c0_76 = arith.constant 0 : index
      %c0_77 = arith.constant 0 : index
      %116 = vector.load %arg5[%c0_76, %c0_77] : memref<32x32xf32, #tpu.memory_space<vmem>>, vector<32x32xf32>
      %cst_78 = arith.constant dense<0.000000e+00> : vector<8x32xf32>
      %117 = tpu.matmul %115, %116, %cst_78 {dimension_numbers = #tpu.dot_dimension_numbers<[1], [0], [0], [1], [0, 0, 1, 1], [], []>} : vector<8x32xf32>, vector<32x32xf32>, vector<8x32xf32> -> vector<8x32xf32>
      %c0_79 = arith.constant 0 : index
      %c0_80 = arith.constant 0 : index
      %118 = vector.load %arg10[%c0_79, %c0_80] : memref<8x32xf32, #tpu.memory_space<vmem>>, vector<8x32xf32>
      tpu.vector_store %arg10[%c0_79, %c0_80], %117 {strides = array<i32>} : memref<8x32xf32, #tpu.memory_space<vmem>>, vector<8x32xf32>,
      %cst_81 = arith.constant 0xFF800000 : f32
      %119 = vector.broadcast %cst_81 : f32 to vector<8x4xf32>
      %c0_82 = arith.constant 0 : index
      %c0_83 = arith.constant 0 : index
      %120 = vector.load %arg12[%c0_82, %c0_83] : memref<8x4xf32, #tpu.memory_space<vmem>>, vector<8x4xf32>
      tpu.vector_store %arg12[%c0_82, %c0_83], %119 {strides = array<i32>} : memref<8x4xf32, #tpu.memory_space<vmem>>, vector<8x4xf32>,
      %cst_84 = arith.constant 0.000000e+00 : f32
      %121 = vector.broadcast %cst_84 : f32 to vector<8x4xf32>
      %c0_85 = arith.constant 0 : index
      %c0_86 = arith.constant 0 : index
      %122 = vector.load %arg13[%c0_85, %c0_86] : memref<8x4xf32, #tpu.memory_space<vmem>>, vector<8x4xf32>
      tpu.vector_store %arg13[%c0_85, %c0_86], %121 {strides = array<i32>} : memref<8x4xf32, #tpu.memory_space<vmem>>, vector<8x4xf32>,
      %cst_87 = arith.constant 0.000000e+00 : f32
      %123 = vector.broadcast %cst_87 : f32 to vector<8x32xf32>
      %c0_88 = arith.constant 0 : index
      %c0_89 = arith.constant 0 : index
      %124 = vector.load %arg11[%c0_88, %c0_89] : memref<8x32xf32, #tpu.memory_space<vmem>>, vector<8x32xf32>
      tpu.vector_store %arg11[%c0_88, %c0_89], %123 {strides = array<i32>} : memref<8x32xf32, #tpu.memory_space<vmem>>, vector<8x32xf32>,
    } else {
    }
    %c0 = arith.constant 0 : index
    %c0_1 = arith.constant 0 : index
    %c0_2 = arith.constant 0 : index
    %3 = vector.load %arg4[%c0, %c0_1, %c0_2] : memref<1x8x32xf32, #tpu.memory_space<vmem>>, vector<1x8x32xf32>
    %4 = vector.shape_cast %3 : vector<1x8x32xf32> to vector<8x32xf32>
    %c0_3 = arith.constant 0 : index
    %c0_4 = arith.constant 0 : index
    %5 = vector.load %arg6[%c0_3, %c0_4] : memref<32x64xf32, #tpu.memory_space<vmem>>, vector<32x64xf32>
    %cst = arith.constant dense<0.000000e+00> : vector<8x64xf32>
    %6 = tpu.matmul %4, %5, %cst {dimension_numbers = #tpu.dot_dimension_numbers<[1], [0], [0], [1], [0, 0, 1, 1], [], []>} : vector<8x32xf32>, vector<32x64xf32>, vector<8x64xf32> -> vector<8x64xf32>
    %c0_5 = arith.constant 0 : index
    %c0_6 = arith.constant 0 : index
    %7 = vector.load %arg10[%c0_5, %c0_6] : memref<8x32xf32, #tpu.memory_space<vmem>>, vector<8x8xf32>
    %8 = vector.extract_strided_slice %6 {offsets = [0, 0], sizes = [8, 8], strides = [1, 1]} : vector<8x64xf32> to vector<8x8xf32>
    %9 = vector.extract_strided_slice %6 {offsets = [0, 32], sizes = [8, 8], strides = [1, 1]} : vector<8x64xf32> to vector<8x8xf32>
    "tpu.trace_start"() <{level = 10 : i32, message = "qd,kd->qk"}> : () -> ()
    %cst_7 = arith.constant dense<0.000000e+00> : vector<8x8xf32>
    %10 = tpu.matmul %7, %8, %cst_7 {dimension_numbers = #tpu.dot_dimension_numbers<[1], [1], [0], [0], [0, 0, 1, 0], [], []>} : vector<8x8xf32>, vector<8x8xf32>, vector<8x8xf32> -> vector<8x8xf32>
    "tpu.trace_stop"() : () -> ()
    %c0_8 = arith.constant 0 : index
    %c0_9 = arith.constant 0 : index
    %11 = vector.load %arg12[%c0_8, %c0_9] : memref<8x4xf32, #tpu.memory_space<vmem>>, vector<8x1xf32>
    %cst_10 = arith.constant dense<0xFF800000> : vector<8xf32>
    %12 = vector.multi_reduction <maximumf>, %10, %cst_10 [1] : vector<8x8xf32> to vector<8xf32>
    %13 = vector.shape_cast %12 : vector<8xf32> to vector<8x1xf32>
    %14 = arith.maximumf %11, %13 : vector<8x1xf32>
    %15 = arith.subf %11, %14 : vector<8x1xf32>
    %16 = math.exp %15 : vector<8x1xf32>
    %17 = vector.broadcast %14 : vector<8x1xf32> to vector<8x8xf32>
    %18 = arith.subf %10, %17 : vector<8x8xf32>
    %19 = math.exp %18 : vector<8x8xf32>
    %c0_11 = arith.constant 0 : index
    %c0_12 = arith.constant 0 : index
    %20 = vector.load %arg13[%c0_11, %c0_12] : memref<8x4xf32, #tpu.memory_space<vmem>>, vector<8x1xf32>
    %21 = arith.mulf %16, %20 : vector<8x1xf32>
    %cst_13 = arith.constant dense<0.000000e+00> : vector<8xf32>
    %22 = vector.multi_reduction <add>, %19, %cst_13 [1] : vector<8x8xf32> to vector<8xf32>
    %23 = vector.shape_cast %22 : vector<8xf32> to vector<8x1xf32>
    %24 = arith.addf %21, %23 : vector<8x1xf32>
    %c0_14 = arith.constant 0 : index
    %c0_15 = arith.constant 0 : index
    %25 = vector.load %arg13[%c0_14, %c0_15] : memref<8x4xf32, #tpu.memory_space<vmem>>, vector<8x1xf32>
    tpu.vector_store %arg13[%c0_14, %c0_15], %24 {strides = array<i32>} : memref<8x4xf32, #tpu.memory_space<vmem>>, vector<8x1xf32>,
    %cst_16 = arith.constant dense<0.000000e+00> : vector<8x8xf32>
    %26 = tpu.matmul %19, %9, %cst_16 {dimension_numbers = #tpu.dot_dimension_numbers<[1], [0], [0], [1], [0, 0, 1, 1], [], []>} : vector<8x8xf32>, vector<8x8xf32>, vector<8x8xf32> -> vector<8x8xf32>
    %c0_17 = arith.constant 0 : index
    %c0_18 = arith.constant 0 : index
    %27 = vector.load %arg11[%c0_17, %c0_18] : memref<8x32xf32, #tpu.memory_space<vmem>>, vector<8x8xf32>
    %28 = vector.broadcast %16 : vector<8x1xf32> to vector<8x8xf32>
    %29 = arith.mulf %28, %27 : vector<8x8xf32>
    %30 = arith.addf %29, %26 : vector<8x8xf32>
    %c0_19 = arith.constant 0 : index
    %c0_20 = arith.constant 0 : index
    %31 = vector.load %arg11[%c0_19, %c0_20] : memref<8x32xf32, #tpu.memory_space<vmem>>, vector<8x8xf32>
    tpu.vector_store %arg11[%c0_19, %c0_20], %30 {strides = array<i32>} : memref<8x32xf32, #tpu.memory_space<vmem>>, vector<8x8xf32>,
    %c0_21 = arith.constant 0 : index
    %c0_22 = arith.constant 0 : index
    %32 = vector.load %arg12[%c0_21, %c0_22] : memref<8x4xf32, #tpu.memory_space<vmem>>, vector<8x1xf32>
    tpu.vector_store %arg12[%c0_21, %c0_22], %14 {strides = array<i32>} : memref<8x4xf32, #tpu.memory_space<vmem>>, vector<8x1xf32>,
    %c0_23 = arith.constant 0 : index
    %c8 = arith.constant 8 : index
    %33 = vector.load %arg10[%c0_23, %c8] : memref<8x32xf32, #tpu.memory_space<vmem>>, vector<8x8xf32>
    %34 = vector.extract_strided_slice %6 {offsets = [0, 8], sizes = [8, 8], strides = [1, 1]} : vector<8x64xf32> to vector<8x8xf32>
    %35 = vector.extract_strided_slice %6 {offsets = [0, 40], sizes = [8, 8], strides = [1, 1]} : vector<8x64xf32> to vector<8x8xf32>
    "tpu.trace_start"() <{level = 10 : i32, message = "qd,kd->qk"}> : () -> ()
    %cst_24 = arith.constant dense<0.000000e+00> : vector<8x8xf32>
    %36 = tpu.matmul %33, %34, %cst_24 {dimension_numbers = #tpu.dot_dimension_numbers<[1], [1], [0], [0], [0, 0, 1, 0], [], []>} : vector<8x8xf32>, vector<8x8xf32>, vector<8x8xf32> -> vector<8x8xf32>
    "tpu.trace_stop"() : () -> ()
    %c0_25 = arith.constant 0 : index
    %c1 = arith.constant 1 : index
    %37 = vector.load %arg12[%c0_25, %c1] : memref<8x4xf32, #tpu.memory_space<vmem>>, vector<8x1xf32>
    %cst_26 = arith.constant dense<0xFF800000> : vector<8xf32>
    %38 = vector.multi_reduction <maximumf>, %36, %cst_26 [1] : vector<8x8xf32> to vector<8xf32>
    %39 = vector.shape_cast %38 : vector<8xf32> to vector<8x1xf32>
    %40 = arith.maximumf %37, %39 : vector<8x1xf32>
    %41 = arith.subf %37, %40 : vector<8x1xf32>
    %42 = math.exp %41 : vector<8x1xf32>
    %43 = vector.broadcast %40 : vector<8x1xf32> to vector<8x8xf32>
    %44 = arith.subf %36, %43 : vector<8x8xf32>
    %45 = math.exp %44 : vector<8x8xf32>
    %c0_27 = arith.constant 0 : index
    %c1_28 = arith.constant 1 : index
    %46 = vector.load %arg13[%c0_27, %c1_28] : memref<8x4xf32, #tpu.memory_space<vmem>>, vector<8x1xf32>
    %47 = arith.mulf %42, %46 : vector<8x1xf32>
    %cst_29 = arith.constant dense<0.000000e+00> : vector<8xf32>
    %48 = vector.multi_reduction <add>, %45, %cst_29 [1] : vector<8x8xf32> to vector<8xf32>
    %49 = vector.shape_cast %48 : vector<8xf32> to vector<8x1xf32>
    %50 = arith.addf %47, %49 : vector<8x1xf32>
    %c0_30 = arith.constant 0 : index
    %c1_31 = arith.constant 1 : index
    %51 = vector.load %arg13[%c0_30, %c1_31] : memref<8x4xf32, #tpu.memory_space<vmem>>, vector<8x1xf32>
    tpu.vector_store %arg13[%c0_30, %c1_31], %50 {strides = array<i32>} : memref<8x4xf32, #tpu.memory_space<vmem>>, vector<8x1xf32>,
    %cst_32 = arith.constant dense<0.000000e+00> : vector<8x8xf32>
    %52 = tpu.matmul %45, %35, %cst_32 {dimension_numbers = #tpu.dot_dimension_numbers<[1], [0], [0], [1], [0, 0, 1, 1], [], []>} : vector<8x8xf32>, vector<8x8xf32>, vector<8x8xf32> -> vector<8x8xf32>
    %c0_33 = arith.constant 0 : index
    %c8_34 = arith.constant 8 : index
    %53 = vector.load %arg11[%c0_33, %c8_34] : memref<8x32xf32, #tpu.memory_space<vmem>>, vector<8x8xf32>
    %54 = vector.broadcast %42 : vector<8x1xf32> to vector<8x8xf32>
    %55 = arith.mulf %54, %53 : vector<8x8xf32>
    %56 = arith.addf %55, %52 : vector<8x8xf32>
    %c0_35 = arith.constant 0 : index
    %c8_36 = arith.constant 8 : index
    %57 = vector.load %arg11[%c0_35, %c8_36] : memref<8x32xf32, #tpu.memory_space<vmem>>, vector<8x8xf32>
    tpu.vector_store %arg11[%c0_35, %c8_36], %56 {strides = array<i32>} : memref<8x32xf32, #tpu.memory_space<vmem>>, vector<8x8xf32>,
    %c0_37 = arith.constant 0 : index
    %c1_38 = arith.constant 1 : index
    %58 = vector.load %arg12[%c0_37, %c1_38] : memref<8x4xf32, #tpu.memory_space<vmem>>, vector<8x1xf32>
    tpu.vector_store %arg12[%c0_37, %c1_38], %40 {strides = array<i32>} : memref<8x4xf32, #tpu.memory_space<vmem>>, vector<8x1xf32>,
    %c0_39 = arith.constant 0 : index
    %c16 = arith.constant 16 : index
    %59 = vector.load %arg10[%c0_39, %c16] : memref<8x32xf32, #tpu.memory_space<vmem>>, vector<8x8xf32>
    %60 = vector.extract_strided_slice %6 {offsets = [0, 16], sizes = [8, 8], strides = [1, 1]} : vector<8x64xf32> to vector<8x8xf32>
    %61 = vector.extract_strided_slice %6 {offsets = [0, 48], sizes = [8, 8], strides = [1, 1]} : vector<8x64xf32> to vector<8x8xf32>
    "tpu.trace_start"() <{level = 10 : i32, message = "qd,kd->qk"}> : () -> ()
    %cst_40 = arith.constant dense<0.000000e+00> : vector<8x8xf32>
    %62 = tpu.matmul %59, %60, %cst_40 {dimension_numbers = #tpu.dot_dimension_numbers<[1], [1], [0], [0], [0, 0, 1, 0], [], []>} : vector<8x8xf32>, vector<8x8xf32>, vector<8x8xf32> -> vector<8x8xf32>
    "tpu.trace_stop"() : () -> ()
    %c0_41 = arith.constant 0 : index
    %c2 = arith.constant 2 : index
    %63 = vector.load %arg12[%c0_41, %c2] : memref<8x4xf32, #tpu.memory_space<vmem>>, vector<8x1xf32>
    %cst_42 = arith.constant dense<0xFF800000> : vector<8xf32>
    %64 = vector.multi_reduction <maximumf>, %62, %cst_42 [1] : vector<8x8xf32> to vector<8xf32>
    %65 = vector.shape_cast %64 : vector<8xf32> to vector<8x1xf32>
    %66 = arith.maximumf %63, %65 : vector<8x1xf32>
    %67 = arith.subf %63, %66 : vector<8x1xf32>
    %68 = math.exp %67 : vector<8x1xf32>
    %69 = vector.broadcast %66 : vector<8x1xf32> to vector<8x8xf32>
    %70 = arith.subf %62, %69 : vector<8x8xf32>
    %71 = math.exp %70 : vector<8x8xf32>
    %c0_43 = arith.constant 0 : index
    %c2_44 = arith.constant 2 : index
    %72 = vector.load %arg13[%c0_43, %c2_44] : memref<8x4xf32, #tpu.memory_space<vmem>>, vector<8x1xf32>
    %73 = arith.mulf %68, %72 : vector<8x1xf32>
    %cst_45 = arith.constant dense<0.000000e+00> : vector<8xf32>
    %74 = vector.multi_reduction <add>, %71, %cst_45 [1] : vector<8x8xf32> to vector<8xf32>
    %75 = vector.shape_cast %74 : vector<8xf32> to vector<8x1xf32>
    %76 = arith.addf %73, %75 : vector<8x1xf32>
    %c0_46 = arith.constant 0 : index
    %c2_47 = arith.constant 2 : index
    %77 = vector.load %arg13[%c0_46, %c2_47] : memref<8x4xf32, #tpu.memory_space<vmem>>, vector<8x1xf32>
    tpu.vector_store %arg13[%c0_46, %c2_47], %76 {strides = array<i32>} : memref<8x4xf32, #tpu.memory_space<vmem>>, vector<8x1xf32>,
    %cst_48 = arith.constant dense<0.000000e+00> : vector<8x8xf32>
    %78 = tpu.matmul %71, %61, %cst_48 {dimension_numbers = #tpu.dot_dimension_numbers<[1], [0], [0], [1], [0, 0, 1, 1], [], []>} : vector<8x8xf32>, vector<8x8xf32>, vector<8x8xf32> -> vector<8x8xf32>
    %c0_49 = arith.constant 0 : index
    %c16_50 = arith.constant 16 : index
    %79 = vector.load %arg11[%c0_49, %c16_50] : memref<8x32xf32, #tpu.memory_space<vmem>>, vector<8x8xf32>
    %80 = vector.broadcast %68 : vector<8x1xf32> to vector<8x8xf32>
    %81 = arith.mulf %80, %79 : vector<8x8xf32>
    %82 = arith.addf %81, %78 : vector<8x8xf32>
    %c0_51 = arith.constant 0 : index
    %c16_52 = arith.constant 16 : index
    %83 = vector.load %arg11[%c0_51, %c16_52] : memref<8x32xf32, #tpu.memory_space<vmem>>, vector<8x8xf32>
    tpu.vector_store %arg11[%c0_51, %c16_52], %82 {strides = array<i32>} : memref<8x32xf32, #tpu.memory_space<vmem>>, vector<8x8xf32>,
    %c0_53 = arith.constant 0 : index
    %c2_54 = arith.constant 2 : index
    %84 = vector.load %arg12[%c0_53, %c2_54] : memref<8x4xf32, #tpu.memory_space<vmem>>, vector<8x1xf32>
    tpu.vector_store %arg12[%c0_53, %c2_54], %66 {strides = array<i32>} : memref<8x4xf32, #tpu.memory_space<vmem>>, vector<8x1xf32>,
    %c0_55 = arith.constant 0 : index
    %c24 = arith.constant 24 : index
    %85 = vector.load %arg10[%c0_55, %c24] : memref<8x32xf32, #tpu.memory_space<vmem>>, vector<8x8xf32>
    %86 = vector.extract_strided_slice %6 {offsets = [0, 24], sizes = [8, 8], strides = [1, 1]} : vector<8x64xf32> to vector<8x8xf32>
    %87 = vector.extract_strided_slice %6 {offsets = [0, 56], sizes = [8, 8], strides = [1, 1]} : vector<8x64xf32> to vector<8x8xf32>
    "tpu.trace_start"() <{level = 10 : i32, message = "qd,kd->qk"}> : () -> ()
    %cst_56 = arith.constant dense<0.000000e+00> : vector<8x8xf32>
    %88 = tpu.matmul %85, %86, %cst_56 {dimension_numbers = #tpu.dot_dimension_numbers<[1], [1], [0], [0], [0, 0, 1, 0], [], []>} : vector<8x8xf32>, vector<8x8xf32>, vector<8x8xf32> -> vector<8x8xf32>
    "tpu.trace_stop"() : () -> ()
    %c0_57 = arith.constant 0 : index
    %c3 = arith.constant 3 : index
    %89 = vector.load %arg12[%c0_57, %c3] : memref<8x4xf32, #tpu.memory_space<vmem>>, vector<8x1xf32>
    %cst_58 = arith.constant dense<0xFF800000> : vector<8xf32>
    %90 = vector.multi_reduction <maximumf>, %88, %cst_58 [1] : vector<8x8xf32> to vector<8xf32>
    %91 = vector.shape_cast %90 : vector<8xf32> to vector<8x1xf32>
    %92 = arith.maximumf %89, %91 : vector<8x1xf32>
    %93 = arith.subf %89, %92 : vector<8x1xf32>
    %94 = math.exp %93 : vector<8x1xf32>
    %95 = vector.broadcast %92 : vector<8x1xf32> to vector<8x8xf32>
    %96 = arith.subf %88, %95 : vector<8x8xf32>
    %97 = math.exp %96 : vector<8x8xf32>
    %c0_59 = arith.constant 0 : index
    %c3_60 = arith.constant 3 : index
    %98 = vector.load %arg13[%c0_59, %c3_60] : memref<8x4xf32, #tpu.memory_space<vmem>>, vector<8x1xf32>
    %99 = arith.mulf %94, %98 : vector<8x1xf32>
    %cst_61 = arith.constant dense<0.000000e+00> : vector<8xf32>
    %100 = vector.multi_reduction <add>, %97, %cst_61 [1] : vector<8x8xf32> to vector<8xf32>
    %101 = vector.shape_cast %100 : vector<8xf32> to vector<8x1xf32>
    %102 = arith.addf %99, %101 : vector<8x1xf32>
    %c0_62 = arith.constant 0 : index
    %c3_63 = arith.constant 3 : index
    %103 = vector.load %arg13[%c0_62, %c3_63] : memref<8x4xf32, #tpu.memory_space<vmem>>, vector<8x1xf32>
    tpu.vector_store %arg13[%c0_62, %c3_63], %102 {strides = array<i32>} : memref<8x4xf32, #tpu.memory_space<vmem>>, vector<8x1xf32>,
    %cst_64 = arith.constant dense<0.000000e+00> : vector<8x8xf32>
    %104 = tpu.matmul %97, %87, %cst_64 {dimension_numbers = #tpu.dot_dimension_numbers<[1], [0], [0], [1], [0, 0, 1, 1], [], []>} : vector<8x8xf32>, vector<8x8xf32>, vector<8x8xf32> -> vector<8x8xf32>
    %c0_65 = arith.constant 0 : index
    %c24_66 = arith.constant 24 : index
    %105 = vector.load %arg11[%c0_65, %c24_66] : memref<8x32xf32, #tpu.memory_space<vmem>>, vector<8x8xf32>
    %106 = vector.broadcast %94 : vector<8x1xf32> to vector<8x8xf32>
    %107 = arith.mulf %106, %105 : vector<8x8xf32>
    %108 = arith.addf %107, %104 : vector<8x8xf32>
    %c0_67 = arith.constant 0 : index
    %c24_68 = arith.constant 24 : index
    %109 = vector.load %arg11[%c0_67, %c24_68] : memref<8x32xf32, #tpu.memory_space<vmem>>, vector<8x8xf32>
    tpu.vector_store %arg11[%c0_67, %c24_68], %108 {strides = array<i32>} : memref<8x32xf32, #tpu.memory_space<vmem>>, vector<8x8xf32>,
    %c0_69 = arith.constant 0 : index
    %c3_70 = arith.constant 3 : index
    %110 = vector.load %arg12[%c0_69, %c3_70] : memref<8x4xf32, #tpu.memory_space<vmem>>, vector<8x1xf32>
    tpu.vector_store %arg12[%c0_69, %c3_70], %92 {strides = array<i32>} : memref<8x4xf32, #tpu.memory_space<vmem>>, vector<8x1xf32>,
    %c0_i32_71 = arith.constant 0 : i32
    %111 = arith.cmpi eq, %arg2, %c0_i32_71 : i32
    %112 = arith.extui %111 : i1 to i32
    %c0_i32_72 = arith.constant 0 : i32
    %113 = arith.cmpi ne, %112, %c0_i32_72 : i32
    scf.if %113 {
      %c0_73 = arith.constant 0 : index
      %c0_74 = arith.constant 0 : index
      %114 = vector.load %arg13[%c0_73, %c0_74] : memref<8x4xf32, #tpu.memory_space<vmem>>, vector<8x4xf32>
      %115 = tpu.reciprocal %114 {approx = true} : vector<8x4xf32> -> vector<8x4xf32>
      %c0_75 = arith.constant 0 : index
      %c0_76 = arith.constant 0 : index
      %116 = vector.load %arg11[%c0_75, %c0_76] : memref<8x32xf32, #tpu.memory_space<vmem>>, vector<8x8xf32>
      %117 = vector.extract_strided_slice %115 {offsets = [0, 0], sizes = [8, 1], strides = [1, 1]} : vector<8x4xf32> to vector<8x1xf32>
      %118 = vector.broadcast %117 : vector<8x1xf32> to vector<8x8xf32>
      %119 = arith.mulf %116, %118 : vector<8x8xf32>
      %c0_77 = arith.constant 0 : index
      %c0_78 = arith.constant 0 : index
      %120 = vector.load %arg11[%c0_77, %c0_78] : memref<8x32xf32, #tpu.memory_space<vmem>>, vector<8x8xf32>
      tpu.vector_store %arg11[%c0_77, %c0_78], %119 {strides = array<i32>} : memref<8x32xf32, #tpu.memory_space<vmem>>, vector<8x8xf32>,
      %c0_79 = arith.constant 0 : index
      %c8_80 = arith.constant 8 : index
      %121 = vector.load %arg11[%c0_79, %c8_80] : memref<8x32xf32, #tpu.memory_space<vmem>>, vector<8x8xf32>
      %122 = vector.extract_strided_slice %115 {offsets = [0, 1], sizes = [8, 1], strides = [1, 1]} : vector<8x4xf32> to vector<8x1xf32>
      %123 = vector.broadcast %122 : vector<8x1xf32> to vector<8x8xf32>
      %124 = arith.mulf %121, %123 : vector<8x8xf32>
      %c0_81 = arith.constant 0 : index
      %c8_82 = arith.constant 8 : index
      %125 = vector.load %arg11[%c0_81, %c8_82] : memref<8x32xf32, #tpu.memory_space<vmem>>, vector<8x8xf32>
      tpu.vector_store %arg11[%c0_81, %c8_82], %124 {strides = array<i32>} : memref<8x32xf32, #tpu.memory_space<vmem>>, vector<8x8xf32>,
      %c0_83 = arith.constant 0 : index
      %c16_84 = arith.constant 16 : index
      %126 = vector.load %arg11[%c0_83, %c16_84] : memref<8x32xf32, #tpu.memory_space<vmem>>, vector<8x8xf32>
      %127 = vector.extract_strided_slice %115 {offsets = [0, 2], sizes = [8, 1], strides = [1, 1]} : vector<8x4xf32> to vector<8x1xf32>
      %128 = vector.broadcast %127 : vector<8x1xf32> to vector<8x8xf32>
      %129 = arith.mulf %126, %128 : vector<8x8xf32>
      %c0_85 = arith.constant 0 : index
      %c16_86 = arith.constant 16 : index
      %130 = vector.load %arg11[%c0_85, %c16_86] : memref<8x32xf32, #tpu.memory_space<vmem>>, vector<8x8xf32>
      tpu.vector_store %arg11[%c0_85, %c16_86], %129 {strides = array<i32>} : memref<8x32xf32, #tpu.memory_space<vmem>>, vector<8x8xf32>,
      %c0_87 = arith.constant 0 : index
      %c24_88 = arith.constant 24 : index
      %131 = vector.load %arg11[%c0_87, %c24_88] : memref<8x32xf32, #tpu.memory_space<vmem>>, vector<8x8xf32>
      %132 = vector.extract_strided_slice %115 {offsets = [0, 3], sizes = [8, 1], strides = [1, 1]} : vector<8x4xf32> to vector<8x1xf32>
      %133 = vector.broadcast %132 : vector<8x1xf32> to vector<8x8xf32>
      %134 = arith.mulf %131, %133 : vector<8x8xf32>
      %c0_89 = arith.constant 0 : index
      %c24_90 = arith.constant 24 : index
      %135 = vector.load %arg11[%c0_89, %c24_90] : memref<8x32xf32, #tpu.memory_space<vmem>>, vector<8x8xf32>
      tpu.vector_store %arg11[%c0_89, %c24_90], %134 {strides = array<i32>} : memref<8x32xf32, #tpu.memory_space<vmem>>, vector<8x8xf32>,
      %c0_91 = arith.constant 0 : index
      %c0_92 = arith.constant 0 : index
      %136 = vector.load %arg11[%c0_91, %c0_92] : memref<8x32xf32, #tpu.memory_space<vmem>>, vector<8x32xf32>
      %c0_93 = arith.constant 0 : index
      %c0_94 = arith.constant 0 : index
      %137 = vector.load %arg7[%c0_93, %c0_94] : memref<32x32xf32, #tpu.memory_space<vmem>>, vector<32x32xf32>
      %cst_95 = arith.constant dense<0.000000e+00> : vector<8x32xf32>
      %138 = tpu.matmul %136, %137, %cst_95 {dimension_numbers = #tpu.dot_dimension_numbers<[1], [0], [0], [1], [0, 0, 1, 1], [], []>} : vector<8x32xf32>, vector<32x32xf32>, vector<8x32xf32> -> vector<8x32xf32>
      %c0_96 = arith.constant 0 : index
      %c0_97 = arith.constant 0 : index
      %139 = vector.load %arg8[%c0_96, %c0_97] : memref<1x32xf32, #tpu.memory_space<vmem>>, vector<1x32xf32>
      %140 = vector.broadcast %139 : vector<1x32xf32> to vector<8x32xf32>
      %141 = arith.addf %138, %140 : vector<8x32xf32>
      %c0_98 = arith.constant 0 : index
      %c0_99 = arith.constant 0 : index
      %c0_100 = arith.constant 0 : index
      %142 = vector.load %arg9[%c0_98, %c0_99, %c0_100] : memref<1x8x32xf32, #tpu.memory_space<vmem>>, vector<1x8x32xf32>
      %143 = vector.shape_cast %142 : vector<1x8x32xf32> to vector<8x32xf32>
      %144 = vector.shape_cast %141 : vector<8x32xf32> to vector<1x8x32xf32>
      tpu.vector_store %arg9[%c0_98, %c0_99, %c0_100], %144 {strides = array<i32>} : memref<1x8x32xf32, #tpu.memory_space<vmem>>, vector<1x8x32xf32>,
    } else {
    }
    return
  }
  func.func @transform_0(%arg0: i32, %arg1: i32, %arg2: i32) -> (i32, i32, i32) {
    %c0_i32 = arith.constant 0 : i32
    %c0_i32_0 = arith.constant 0 : i32
    return %arg0, %arg1, %c0_i32 : i32, i32, i32
  }
  func.func @transform_1(%arg0: i32, %arg1: i32, %arg2: i32) -> (i32, i32, i32) {
    %c0_i32 = arith.constant 0 : i32
    %c0_i32_0 = arith.constant 0 : i32
    return %arg0, %arg2, %c0_i32 : i32, i32, i32
  }
  func.func @transform_2(%arg0: i32, %arg1: i32, %arg2: i32) -> (i32, i32) {
    %c0_i32 = arith.constant 0 : i32
    %c0_i32_0 = arith.constant 0 : i32
    %c0_i32_1 = arith.constant 0 : i32
    return %c0_i32, %c0_i32_0 : i32, i32
  }
  func.func @transform_3(%arg0: i32, %arg1: i32, %arg2: i32) -> (i32, i32) {
    %c0_i32 = arith.constant 0 : i32
    %c0_i32_0 = arith.constant 0 : i32
    %c0_i32_1 = arith.constant 0 : i32
    return %c0_i32, %c0_i32_0 : i32, i32
  }
  func.func @transform_4(%arg0: i32, %arg1: i32, %arg2: i32) -> (i32, i32) {
    %c0_i32 = arith.constant 0 : i32
    %c0_i32_0 = arith.constant 0 : i32
    %c0_i32_1 = arith.constant 0 : i32
    return %c0_i32, %c0_i32_0 : i32, i32
  }
  func.func @transform_5(%arg0: i32, %arg1: i32, %arg2: i32) -> (i32, i32) {
    %c0_i32 = arith.constant 0 : i32
    %c0_i32_0 = arith.constant 0 : i32
    %c0_i32_1 = arith.constant 0 : i32
    return %c0_i32, %c0_i32_0 : i32, i32
  }
  func.func @transform_6(%arg0: i32, %arg1: i32, %arg2: i32) -> (i32, i32, i32) {
    %c0_i32 = arith.constant 0 : i32
    %c0_i32_0 = arith.constant 0 : i32
    return %arg0, %arg1, %c0_i32 : i32, i32, i32
  }
}

</mosaic_0001>

<llo_original>
// kernel: tpu_custom_call.1
$region0: #{tpu_custom_call.1}
  #allocation0 [shape = 'u32[]', space=smem, size = 0x4, offset = 0x4, fixed_abs, tag = 'smem constant byte address 0x4 - core index']
  #allocation1 [shape = 'u32[72,128]{1,0:T(1,128)}', space=vmem, size = 0x9000, scoped, tag = 'internal scratch']
  #allocation2 [shape = 'f32[8,32]{1,0:T(8,128)}', space=vmem, size = 0x1000, scoped, tag = 'scratch operand']
  #allocation3 [shape = 'f32[8,32]{1,0:T(8,128)}', space=vmem, size = 0x1000, scoped, tag = 'scratch operand']
  #allocation4 [shape = 'f32[8,4]{1,0:T(8,128)}', space=vmem, size = 0x1000, scoped, tag = 'scratch operand']
  #allocation5 [shape = 'f32[8,4]{1,0:T(8,128)}', space=vmem, size = 0x1000, scoped, tag = 'scratch operand']
  %s0 = inlined_call_operand.hbm [shape: f32[2,8,32], index: 0, kind: input, shape index: {}]
  %s1 = inlined_call_operand.hbm [shape: f32[2,8,32], index: 1, kind: input, shape index: {}]
  %s2 = inlined_call_operand.hbm [shape: f32[32,32], index: 2, kind: input, shape index: {}]
  %s3 = inlined_call_operand.hbm [shape: f32[32,64], index: 3, kind: input, shape index: {}]
  %s4 = inlined_call_operand.hbm [shape: f32[32,32], index: 4, kind: input, shape index: {}]
  %s5 = inlined_call_operand.vmem [shape: f32[1,32], index: 5, kind: input, shape index: {}]
  %s6 = inlined_call_operand.hbm [shape: f32[2,8,32], index: 6, kind: output, shape index: {}]
  %s7 = sld [smem:[#allocation0]]
  $region85: #{tpu_custom_call.1} parent=0
    _
  %s9 = ssub.s32 1, %s7
  %s10 = scalar_select 0, %s9, %s7
  $region1: #{tpu_custom_call.1} parent=0
    #allocation6 [shape = 'u8[8192]{0}', space=vmem, size = 0x2000, scoped, tag = 'input window, operand 0']
    #allocation7 [shape = 's32[2]{0}', space=sflag, size = 0x8, scoped, tag = 'scoped memory for tpu_custom_call.1']
    #allocation8 [shape = 's32[2]{0}', space=sflag, size = 0x8, scoped, tag = 'scoped memory for tpu_custom_call.1']
    #allocation9 [shape = 'u8[8192]{0}', space=vmem, size = 0x2000, scoped, tag = 'input window, operand 1']
    #allocation10 [shape = 's32[2]{0}', space=sflag, size = 0x8, scoped, tag = 'scoped memory for tpu_custom_call.1']
    #allocation11 [shape = 'u8[16384]{0}', space=vmem, size = 0x4000, scoped, tag = 'input window, operand 2, single buffered']
    #allocation12 [shape = 'u8[16384]{0}', space=vmem, size = 0x4000, scoped, tag = 'input window, operand 3, single buffered']
    #allocation13 [shape = 's32[1]{0}', space=sflag, size = 0x4, scoped, tag = 'scoped memory for tpu_custom_call.1']
    #allocation14 [shape = 'u8[16384]{0}', space=vmem, size = 0x4000, scoped, tag = 'input window, operand 4, single buffered']
    #allocation15 [shape = 'u8[8192]{0}', space=vmem, size = 0x2000, scoped, tag = 'output window, operand 0']
    %11 = vsyncpa [#allocation7], 0
    %s12 = scalar_lea.sflag [#allocation7], 1
    %13 = vsyncpa %s12, 0
    %14 = vsyncpa [#allocation10], 0
    %s15 = scalar_lea.sflag [#allocation10], 1
    %16 = vsyncpa %s15, 0
    %17 = vsyncpa [#allocation13], 0
    %18 = vsyncpa [#allocation8], 0
    %s19 = scalar_lea.sflag [#allocation8], 1
    %20 = vsyncpa %s19, 0
    loop: start=0, step=1, limit=4
    $region2: #{tpu_custom_call.1} parent=1 // loop_pre_header
      _
    $region3: #{tpu_custom_call.1} parent=1 // loop_header
      %s22 = sphi 0, %s26
      %p23 = scmp.ge.s32.totalorder %s22, 4
      %s29 = sphi 0, %s48
      %s30 = sphi 0, %s44
      %s31 = sphi 0, %s40
      %s32 = sphi 0, %s29
      %s33 = sphi 0, %s30
      %s34 = sphi 0, %s31
      %s35 = sphi 0, %s32
      %s36 = sphi 0, %s33
      %s37 = sphi 0, %s34
      %s53 = sphi 0, %s55
      %s56 = sphi 0, %s53
      %s57 = sphi 0, %s56
      %s73 = sphi 0, %s57
      %s81 = sphi 0, %s83
      %s84 = sphi 0, %s81
      %s85 = sphi 0, %s84
      %s101 = sphi 0, %s85
      %s105 = sphi 0, %s105
      %s107 = sphi 0, %s105
      %s108 = sphi 0, %s107
      %s122 = sphi 0, %s108
      %s126 = sphi 0, %s126
      %s128 = sphi 0, %s126
      %s129 = sphi 0, %s128
      %s143 = sphi 0, %s129
      %s147 = sphi 0, %s147
      %s149 = sphi 0, %s147
      %s150 = sphi 0, %s149
      %s164 = sphi 0, %s150
      %s168 = sphi 0, %s168
      %s170 = sphi 0, %s168
      %s171 = sphi 0, %s170
      %s185 = sphi 0, %s171
      %s193 = sphi 0, %s195
      %s196 = sphi 0, %s193
      %s197 = sphi 0, %s196
      %s213 = sphi 0, %s197
    $region4: #{tpu_custom_call.1} parent=1 // loop_header_branch
      %25 = sbr.rel (%p23) target = $region8
    $region5: #{tpu_custom_call.1} parent=1 // loop_body
      %s27 = ssub.s32 %s22, 1
      %s28 = ssub.s32 %s22, 2
      %s38 = sadd.s32 1, %s31
      %p39 = scmp.ge.s32.totalorder %s38, 1
      %s40 = scalar_select %p39, 0, %s38
      %s41 = sadd.s32 1, %s30
      %s42 = scalar_select %p39, %s41, %s30
      %p43 = scmp.ge.s32.totalorder %s42, 1
      %s44 = scalar_select %p43, 0, %s42
      %s45 = sadd.s32 1, %s29
      %s46 = scalar_select %p43, %s45, %s29
      %p47 = scmp.ge.s32.totalorder %s46, 2
      %s48 = scalar_select %p47, 0, %s46
      %s49 = ssub.s32 %s29, %s48
      %s50 = ssub.s32 %s30, %s44
      %s51 = sor.u32 %s49, %s50
      %p52 = scmp.eq.s32.totalorder %s51, 0
      %s54 = sadd.s32 %s53, 1
      %s55 = scalar_select %p52, %s53, %s54
      %p58 = pneg %p52
      %p59 = scmp.eq.s32.totalorder %s22, 1
      %p60 = por %p58, %p59
      %p61 = scmp.ne.s32.totalorder %s53, %s56
      %p62 = scmp.eq.s32.totalorder %s22, 0
      %p63 = por %p61, %p62
      %p64 = scmp.ne.s32.totalorder %s53, %s56
      %p65 = scmp.eq.s32.totalorder %s27, 1
      %p66 = por %p64, %p65
      %p67 = scmp.ne.s32.totalorder %s56, %s57
      %p68 = scmp.eq.s32.totalorder %s27, 0
      %p69 = por %p67, %p68
      %p70 = scmp.ne.s32.totalorder %s56, %s57
      %p71 = scmp.eq.s32.totalorder %s28, 1
      %p72 = por %p70, %p71
      %p74 = scmp.ne.s32.totalorder %s57, %s73
      %p75 = scmp.eq.s32.totalorder %s28, 0
      %p76 = por %p74, %p75
      %s77 = ssub.s32 %s29, %s48
      %s78 = ssub.s32 %s31, %s40
      %s79 = sor.u32 %s77, %s78
      %p80 = scmp.eq.s32.totalorder %s79, 0
      %s82 = sadd.s32 %s81, 1
      %s83 = scalar_select %p80, %s81, %s82
      %p86 = pneg %p80
      %p87 = scmp.eq.s32.totalorder %s22, 1
      %p88 = por %p86, %p87
      %p89 = scmp.ne.s32.totalorder %s81, %s84
      %p90 = scmp.eq.s32.totalorder %s22, 0
      %p91 = por %p89, %p90
      %p92 = scmp.ne.s32.totalorder %s81, %s84
      %p93 = scmp.eq.s32.totalorder %s27, 1
      %p94 = por %p92, %p93
      %p95 = scmp.ne.s32.totalorder %s84, %s85
      %p96 = scmp.eq.s32.totalorder %s27, 0
      %p97 = por %p95, %p96
      %p98 = scmp.ne.s32.totalorder %s84, %s85
      %p99 = scmp.eq.s32.totalorder %s28, 1
      %p100 = por %p98, %p99
      %p102 = scmp.ne.s32.totalorder %s85, %s101
      %p103 = scmp.eq.s32.totalorder %s28, 0
      %p104 = por %p102, %p103
      %s106 = sadd.s32 %s105, 1
      %p109 = scmp.eq.s32.totalorder %s22, 1
      %p110 = scmp.ne.s32.totalorder %s105, %s107
      %p111 = scmp.eq.s32.totalorder %s22, 0
      %p112 = por %p110, %p111
      %p113 = scmp.ne.s32.totalorder %s105, %s107
      %p114 = scmp.eq.s32.totalorder %s27, 1
      %p115 = por %p113, %p114
      %p116 = scmp.ne.s32.totalorder %s107, %s108
      %p117 = scmp.eq.s32.totalorder %s27, 0
      %p118 = por %p116, %p117
      %p119 = scmp.ne.s32.totalorder %s107, %s108
      %p120 = scmp.eq.s32.totalorder %s28, 1
      %p121 = por %p119, %p120
      %p123 = scmp.ne.s32.totalorder %s108, %s122
      %p124 = scmp.eq.s32.totalorder %s28, 0
      %p125 = por %p123, %p124
      %s127 = sadd.s32 %s126, 1
      %p130 = scmp.eq.s32.totalorder %s22, 1
      %p131 = scmp.ne.s32.totalorder %s126, %s128
      %p132 = scmp.eq.s32.totalorder %s22, 0
      %p133 = por %p131, %p132
      %p134 = scmp.ne.s32.totalorder %s126, %s128
      %p135 = scmp.eq.s32.totalorder %s27, 1
      %p136 = por %p134, %p135
      %p137 = scmp.ne.s32.totalorder %s128, %s129
      %p138 = scmp.eq.s32.totalorder %s27, 0
      %p139 = por %p137, %p138
      %p140 = scmp.ne.s32.totalorder %s128, %s129
      %p141 = scmp.eq.s32.totalorder %s28, 1
      %p142 = por %p140, %p141
      %p144 = scmp.ne.s32.totalorder %s129, %s143
      %p145 = scmp.eq.s32.totalorder %s28, 0
      %p146 = por %p144, %p145
      %s148 = sadd.s32 %s147, 1
      %p151 = scmp.eq.s32.totalorder %s22, 1
      %p152 = scmp.ne.s32.totalorder %s147, %s149
      %p153 = scmp.eq.s32.totalorder %s22, 0
      %p154 = por %p152, %p153
      %p155 = scmp.ne.s32.totalorder %s147, %s149
      %p156 = scmp.eq.s32.totalorder %s27, 1
      %p157 = por %p155, %p156
      %p158 = scmp.ne.s32.totalorder %s149, %s150
      %p159 = scmp.eq.s32.totalorder %s27, 0
      %p160 = por %p158, %p159
      %p161 = scmp.ne.s32.totalorder %s149, %s150
      %p162 = scmp.eq.s32.totalorder %s28, 1
      %p163 = por %p161, %p162
      %p165 = scmp.ne.s32.totalorder %s150, %s164
      %p166 = scmp.eq.s32.totalorder %s28, 0
      %p167 = por %p165, %p166
      %s169 = sadd.s32 %s168, 1
      %p172 = scmp.eq.s32.totalorder %s22, 1
      %p173 = scmp.ne.s32.totalorder %s168, %s170
      %p174 = scmp.eq.s32.totalorder %s22, 0
      %p175 = por %p173, %p174
      %p176 = scmp.ne.s32.totalorder %s168, %s170
      %p177 = scmp.eq.s32.totalorder %s27, 1
      %p178 = por %p176, %p177
      %p179 = scmp.ne.s32.totalorder %s170, %s171
      %p180 = scmp.eq.s32.totalorder %s27, 0
      %p181 = por %p179, %p180
      %p182 = scmp.ne.s32.totalorder %s170, %s171
      %p183 = scmp.eq.s32.totalorder %s28, 1
      %p184 = por %p182, %p183
      %p186 = scmp.ne.s32.totalorder %s171, %s185
      %p187 = scmp.eq.s32.totalorder %s28, 0
      %p188 = por %p186, %p187
      %s189 = ssub.s32 %s29, %s48
      %s190 = ssub.s32 %s30, %s44
      %s191 = sor.u32 %s189, %s190
      %p192 = scmp.eq.s32.totalorder %s191, 0
      %s194 = sadd.s32 %s193, 1
      %s195 = scalar_select %p192, %s193, %s194
      %p198 = pneg %p192
      %p199 = scmp.eq.s32.totalorder %s22, 1
      %p200 = por %p198, %p199
      %p201 = scmp.ne.s32.totalorder %s193, %s196
      %p202 = scmp.eq.s32.totalorder %s22, 0
      %p203 = por %p201, %p202
      %p204 = scmp.ne.s32.totalorder %s193, %s196
      %p205 = scmp.eq.s32.totalorder %s27, 1
      %p206 = por %p204, %p205
      %p207 = scmp.ne.s32.totalorder %s196, %s197
      %p208 = scmp.eq.s32.totalorder %s27, 0
      %p209 = por %p207, %p208
      %p210 = scmp.ne.s32.totalorder %s196, %s197
      %p211 = scmp.eq.s32.totalorder %s28, 1
      %p212 = por %p210, %p211
      %p214 = scmp.ne.s32.totalorder %s197, %s213
      %p215 = scmp.eq.s32.totalorder %s28, 0
      %p216 = por %p214, %p215
      %p217 = scmp.le.s32.totalorder 1, %s22
      %p218 = scmp.lt.s32.totalorder %s22, 3
      %p219 = pnand %p217, %p218
      %p220 = pneg %p219
      // Predicated region
      $region9: #{tpu_custom_call.1} parent=5 // pred_check
        _
      $region10: #{tpu_custom_call.1} parent=5 // pred_check_branch
        %222 = sbr.rel (%p219) target = $region12
      $region11: #{tpu_custom_call.1} parent=5 // pred_region
        %s223 = ssub.s32 %s22, 1
        // Predicated region
        $region13: #{tpu_custom_call.1} parent=11 // pred_check
          %p224 = pneg %p118
        $region14: #{tpu_custom_call.1} parent=11 // pred_check_branch
          %226 = sbr.rel (%p224) target = $region16
        $region15: #{tpu_custom_call.1} parent=11 // pred_region
          %228 = vsyncadd [#allocation10], 0
          %s229 = sshll.u32 %s2, 4
          %s230 = int_to_ptr.hbm [resolvable:$true] %s229
          %s231 = sshll.u32 [#allocation11], 4
          %s232 = int_to_ptr.vmem [resolvable:$true] %s231
          %237 = dma.hbm_to_vmem [thread:$0]  %s230, 512, %s232, [#allocation10], 128, 128, 8
        $region16: #{tpu_custom_call.1} parent=11 // pred_fallthru
          _
        // Predicated region
        $region17: #{tpu_custom_call.1} parent=11 // pred_check
          %p238 = pneg %p139
        $region18: #{tpu_custom_call.1} parent=11 // pred_check_branch
          %240 = sbr.rel (%p238) target = $region20
        $region19: #{tpu_custom_call.1} parent=11 // pred_region
          %242 = vsyncadd [#allocation13], 0
          %s243 = sshll.u32 %s3, 4
          %s244 = int_to_ptr.hbm [resolvable:$true] %s243
          %s245 = sshll.u32 [#allocation12], 4
          %s246 = int_to_ptr.vmem [resolvable:$true] %s245
          %251 = dma.hbm_to_vmem [thread:$0]  %s244, 512, %s246, [#allocation13], 128, 128, 8
        $region20: #{tpu_custom_call.1} parent=11 // pred_fallthru
          _
        // Predicated region
        $region21: #{tpu_custom_call.1} parent=11 // pred_check
          %p252 = pneg %p160
        $region22: #{tpu_custom_call.1} parent=11 // pred_check_branch
          %254 = sbr.rel (%p252) target = $region24
        $region23: #{tpu_custom_call.1} parent=11 // pred_region
          %256 = vsyncadd [#allocation13], 0
          %s257 = sshll.u32 %s4, 4
          %s258 = int_to_ptr.hbm [resolvable:$true] %s257
          %s259 = sshll.u32 [#allocation14], 4
          %s260 = int_to_ptr.vmem [resolvable:$true] %s259
          %265 = dma.hbm_to_vmem [thread:$0]  %s258, 512, %s260, [#allocation13], 128, 128, 8
        $region24: #{tpu_custom_call.1} parent=11 // pred_fallthru
          _
        // Predicated region
        $region25: #{tpu_custom_call.1} parent=11 // pred_check
          %p266 = pneg %p181
        $region26: #{tpu_custom_call.1} parent=11 // pred_check_branch
          %268 = sbr.rel (%p266) target = $region28
        $region27: #{tpu_custom_call.1} parent=11 // pred_region
          _
        $region28: #{tpu_custom_call.1} parent=11 // pred_fallthru
          _
      $region12: #{tpu_custom_call.1} parent=5 // pred_fallthru
        _
      %p269 = scmp.lt.s32.totalorder %s22, 2
      // Predicated region
      $region29: #{tpu_custom_call.1} parent=5 // pred_check
        %p270 = pneg %p269
      $region30: #{tpu_custom_call.1} parent=5 // pred_check_branch
        %272 = sbr.rel (%p270) target = $region32
      $region31: #{tpu_custom_call.1} parent=5 // pred_region
        // Predicated region
        $region33: #{tpu_custom_call.1} parent=31 // pred_check
          %p273 = pneg %p63
        $region34: #{tpu_custom_call.1} parent=31 // pred_check_branch
          %275 = sbr.rel (%p273) target = $region36
        $region35: #{tpu_custom_call.1} parent=31 // pred_region
          %s276 = sand.u32 %s53, 1
          %s277 = scalar_lea.sflag [#allocation7], %s276
          %s278 = sand.u32 %s53, 1
          %s279 = smul.addr %s278, 8
          %s280 = scalar_lea.vmem [#allocation6], %s279
          %282 = vsyncadd %s277, 0
          %s283 = sadd.s32 %s30, %s29
          %s284 = smul.addr %s283, 8
          %s285 = scalar_lea.hbm %s0, %s284
          %s287 = sshll.u32 %s285, 4
          %s288 = int_to_ptr.hbm [resolvable:$true] %s287
          %s289 = sshll.u32 %s280, 4
          %s290 = int_to_ptr.vmem [resolvable:$true] %s289
          %292 = dma.hbm_to_vmem [thread:$0]  %s288, 128, %s290, %s277
        $region36: #{tpu_custom_call.1} parent=31 // pred_fallthru
          _
        // Predicated region
        $region37: #{tpu_custom_call.1} parent=31 // pred_check
          %p293 = pneg %p91
        $region38: #{tpu_custom_call.1} parent=31 // pred_check_branch
          %295 = sbr.rel (%p293) target = $region40
        $region39: #{tpu_custom_call.1} parent=31 // pred_region
          %s296 = sand.u32 %s22, 1
          %s297 = scalar_lea.sflag [#allocation10], %s296
          %s298 = sand.u32 %s81, 1
          %s299 = smul.addr %s298, 8
          %s300 = scalar_lea.vmem [#allocation9], %s299
          %302 = vsyncadd %s297, 0
          %s303 = sadd.s32 %s31, %s29
          %s304 = smul.addr %s303, 8
          %s305 = scalar_lea.hbm %s1, %s304
          %s307 = sshll.u32 %s305, 4
          %s308 = int_to_ptr.hbm [resolvable:$true] %s307
          %s309 = sshll.u32 %s300, 4
          %s310 = int_to_ptr.vmem [resolvable:$true] %s309
          %312 = dma.hbm_to_vmem [thread:$0]  %s308, 128, %s310, %s297
        $region40: #{tpu_custom_call.1} parent=31 // pred_fallthru
          _
      $region32: #{tpu_custom_call.1} parent=5 // pred_fallthru
        _
      %p313 = scmp.le.s32.totalorder 1, %s22
      %p314 = scmp.lt.s32.totalorder %s22, 3
      %p315 = pnand %p313, %p314
      %p316 = pneg %p315
      // Predicated region
      $region41: #{tpu_custom_call.1} parent=5 // pred_check
        _
      $region42: #{tpu_custom_call.1} parent=5 // pred_check_branch
        %318 = sbr.rel (%p315) target = $region44
      $region43: #{tpu_custom_call.1} parent=5 // pred_region
        %s319 = ssub.s32 %s22, 1
        %s320 = sand.u32 %s56, 1
        %s321 = scalar_lea.sflag [#allocation7], %s320
        %s322 = sand.u32 %s56, 1
        %s323 = smul.addr %s322, 8
        %s324 = scalar_lea.vmem [#allocation6], %s323
        // Predicated region
        $region45: #{tpu_custom_call.1} parent=43 // pred_check
          %p325 = pneg %p69
        $region46: #{tpu_custom_call.1} parent=43 // pred_check_branch
          %327 = sbr.rel (%p325) target = $region48
        $region47: #{tpu_custom_call.1} parent=43 // pred_region
          %329 = dma.done %s321, 128
        $region48: #{tpu_custom_call.1} parent=43 // pred_fallthru
          _
        %s330 = sand.u32 %s27, 1
        %s331 = scalar_lea.sflag [#allocation10], %s330
        %s332 = sand.u32 %s84, 1
        %s333 = smul.addr %s332, 8
        %s334 = scalar_lea.vmem [#allocation9], %s333
        // Predicated region
        $region49: #{tpu_custom_call.1} parent=43 // pred_check
          %p335 = pneg %p97
        $region50: #{tpu_custom_call.1} parent=43 // pred_check_branch
          %337 = sbr.rel (%p335) target = $region52
        $region51: #{tpu_custom_call.1} parent=43 // pred_region
          %339 = dma.done %s331, 128
        $region52: #{tpu_custom_call.1} parent=43 // pred_fallthru
          _
        // Predicated region
        $region53: #{tpu_custom_call.1} parent=43 // pred_check
          %p340 = pneg %p118
        $region54: #{tpu_custom_call.1} parent=43 // pred_check_branch
          %342 = sbr.rel (%p340) target = $region56
        $region55: #{tpu_custom_call.1} parent=43 // pred_region
          %344 = dma.done [#allocation10], 512
        $region56: #{tpu_custom_call.1} parent=43 // pred_fallthru
          _
        // Predicated region
        $region57: #{tpu_custom_call.1} parent=43 // pred_check
          %p345 = pneg %p139
        $region58: #{tpu_custom_call.1} parent=43 // pred_check_branch
          %347 = sbr.rel (%p345) target = $region60
        $region59: #{tpu_custom_call.1} parent=43 // pred_region
          %349 = dma.done [#allocation13], 512
        $region60: #{tpu_custom_call.1} parent=43 // pred_fallthru
          _
        // Predicated region
        $region61: #{tpu_custom_call.1} parent=43 // pred_check
          %p350 = pneg %p160
        $region62: #{tpu_custom_call.1} parent=43 // pred_check_branch
          %352 = sbr.rel (%p350) target = $region64
        $region63: #{tpu_custom_call.1} parent=43 // pred_region
          %354 = dma.done [#allocation13], 512
        $region64: #{tpu_custom_call.1} parent=43 // pred_fallthru
          _
        %s355 = sand.u32 %s56, 1
        %s356 = scalar_lea.sflag [#allocation7], %s355
        %s357 = sand.u32 %s56, 1
        %s358 = smul.addr %s357, 8
        %s359 = scalar_lea.vmem [#allocation6], %s358
        %p360 = pneg %p69
        %p361 = pneg %p66
        %s362 = sand.u32 %s27, 1
        %s363 = scalar_lea.sflag [#allocation10], %s362
        %s364 = sand.u32 %s84, 1
        %s365 = smul.addr %s364, 8
        %s366 = scalar_lea.vmem [#allocation9], %s365
        %p367 = pneg %p97
        %p368 = pneg %p94
        %p369 = pneg %p118
        %p370 = pneg %p115
        %p371 = pneg %p139
        %p372 = pneg %p136
        %p373 = pneg %p160
        %p374 = pneg %p157
        %p375 = pneg %p181
        %p376 = pneg %p178
        %p377 = pneg %p209
        %p378 = pneg %p206
        %s379 = sand.u32 %s196, 1
        %s380 = scalar_lea.sflag [#allocation8], %s379
        %s381 = sand.u32 %s196, 1
        %s382 = smul.addr %s381, 8
        %s383 = scalar_lea.vmem [#allocation15], %s382
        %p384 = scmp.eq.s32.totalorder %s34, 0
        // Predicated region
        $region65: #{tpu_custom_call.1} parent=43 // pred_check
          %p385 = pneg %p384
        $region66: #{tpu_custom_call.1} parent=43 // pred_check_branch
          %387 = sbr.rel (%p385) target = $region68
        $region67: #{tpu_custom_call.1} parent=43 // pred_region
          %v388 = vld [vmem:[%s324] sm:$0xff]
          %v389 = vld [vmem:[#allocation11] sm:$0xff]
          %v390 = vld [vmem:[#allocation11 + $0x8] sm:$0xff]
          %v391 = vld [vmem:[#allocation11 + $0x10] sm:$0xff]
          %v392 = vld [vmem:[#allocation11 + $0x18] sm:$0xff]
          %vm393 = vcmask 261120
          %v395 = vsel %vm393, %v388, 0
          %397 = vmatpush.msra.mxu0 0.0
          %398 = vmatpush.msra.mxu0 0.0
          %399 = vmatpush.msra.mxu0 0.0
          %400 = vmatpush.msra.mxu0 0.0
          %401 = vmatpush.msra.mxu0 0.0
          %402 = vmatpush.msra.mxu0 0.0
          %403 = vmatpush.msra.mxu0 0.0
          %404 = vmatpush.msra.mxu0 0.0
          %405 = vmatpush.msra.mxu0 0.0
          %406 = vmatpush.msra.mxu0 0.0
          %407 = vmatpush.msra.mxu0 0.0
          %408 = vmatpush.msra.mxu0 0.0
          %409 = vmatpush.msra.mxu0 %v392
          %410 = vmatpush.msra.mxu0 %v391
          %411 = vmatpush.msra.mxu0 %v390
          %412 = vmatpush.msra.mxu0 %v389
          %413 = vmatmul.f32.gmra.mxu0 %v395
          %v414 = vpop.f32.mrf.mxu0
          %v415 = vadd.f32 0.0, %v414
          %416 = vdwg.mxu0
          %417 = vst.msk [vmem:[#allocation2] sm:$0xff] %vm393, %v415
          %vm418 = vcmask 31744
          %419 = vst.msk [vmem:[#allocation4] sm:$0xff] %vm418, -inf
          %420 = vst.msk [vmem:[#allocation5] sm:$0xff] %vm418, 0.0
          %421 = vst.msk [vmem:[#allocation3] sm:$0xff] %vm393, 0.0
        $region68: #{tpu_custom_call.1} parent=43 // pred_fallthru
          _
        %v422 = vld [vmem:[%s334] sm:$0xff]
        %v423 = vld [vmem:[#allocation12] sm:$0xff]
        %v424 = vld [vmem:[#allocation12 + $0x8] sm:$0xff]
        %v425 = vld [vmem:[#allocation12 + $0x10] sm:$0xff]
        %v426 = vld [vmem:[#allocation12 + $0x18] sm:$0xff]
        %vm427 = vcmask 261120
        %v429 = vsel %vm427, %v422, 0
        %431 = vmatpush.msra.mxu0 0.0
        %432 = vmatpush.msra.mxu0 0.0
        %433 = vmatpush.msra.mxu0 0.0
        %434 = vmatpush.msra.mxu0 0.0
        %435 = vmatpush.msra.mxu0 0.0
        %436 = vmatpush.msra.mxu0 0.0
        %437 = vmatpush.msra.mxu0 0.0
        %438 = vmatpush.msra.mxu0 0.0
        %439 = vmatpush.msra.mxu0 0.0
        %440 = vmatpush.msra.mxu0 0.0
        %441 = vmatpush.msra.mxu0 0.0
        %442 = vmatpush.msra.mxu0 0.0
        %443 = vmatpush.msra.mxu0 %v426
        %444 = vmatpush.msra.mxu0 %v425
        %445 = vmatpush.msra.mxu0 %v424
        %446 = vmatpush.msra.mxu0 %v423
        %447 = vmatmul.f32.gmra.mxu0 %v429
        %v448 = vpop.f32.mrf.mxu0
        %v449 = vadd.f32 0.0, %v448
        %450 = vdwg.mxu0
        %v451 = vld [vmem:[#allocation2] sm:$0xff]
        %vm452 = vcmask 64512
        %v454 = vsel %vm452, %v451, 0
        %v457 = vsel %vm452, %v449, 0
        %459 = vmatpush.xpose.msra.mxu0 0.0
        %460 = vmatpush.xpose.msra.mxu0 0.0
        %461 = vmatpush.xpose.msra.mxu0 0.0
        %462 = vmatpush.xpose.msra.mxu0 0.0
        %463 = vmatpush.xpose.msra.mxu0 0.0
        %464 = vmatpush.xpose.msra.mxu0 0.0
        %465 = vmatpush.xpose.msra.mxu0 0.0
        %466 = vmatpush.xpose.msra.mxu0 0.0
        %467 = vmatpush.xpose.msra.mxu0 0.0
        %468 = vmatpush.xpose.msra.mxu0 0.0
        %469 = vmatpush.xpose.msra.mxu0 0.0
        %470 = vmatpush.xpose.msra.mxu0 0.0
        %471 = vmatpush.xpose.msra.mxu0 0.0
        %472 = vmatpush.xpose.msra.mxu0 0.0
        %473 = vmatpush.xpose.msra.mxu0 0.0
        %474 = vmatpush.xpose.msra.mxu0 %v457
        %475 = vmatmul.f32.gmra.mxu0 %v454
        %v476 = vpop.f32.mrf.mxu0
        %v477 = vadd.f32 0.0, %v476
        %478 = vdwg.mxu0
        %v479 = vld [vmem:[#allocation4] sm:$0xff]
        %v480 = vsel %vm452, %v477, -inf
        %481 = vmax.xlane.f32.xlu0 %v480
        %v482 = vpop.xlane.xlu0 %481
        %v483 = vmax.f32 %v479, %v482
        %v484 = vsub.f32 %v479, %v483
        %v485 = vmul.f32 %v484, 1.442695
        %v486 = vpow.pop %v485
        %488 = vset.pattern.permute.xlu0 0
        %489 = vperm.xlu0 %488, %v483
        %v490 = vpop.permute.xlu0 %489
        %v492 = vsub.f32 %v477, %v490
        %v493 = vmul.f32 %v492, 1.442695
        %v494 = vpow.pop %v493
        %v495 = vld [vmem:[#allocation5] sm:$0xff]
        %v496 = vmul.f32 %v486, %v495
        %v497 = vsel %vm452, %v494, 0.0
        %498 = vadd.xlane.f32.xlu0 %v497
        %v499 = vpop.xlane.xlu0 %498
        %v500 = vadd.f32 %v496, %v499
        %vm501 = vcmask 7168
        %502 = vst.msk [vmem:[#allocation5] sm:$0xff] %vm501, %v500
        %503 = vrot.lane.b32.xlu0 %v449, 96
        %v504 = vpop.permute.xlu0 %503
        %v507 = vsel %vm452, %v494, 0
        %509 = vmatpush.msra.mxu0 0.0
        %510 = vmatpush.msra.mxu0 0.0
        %511 = vmatpush.msra.mxu0 0.0
        %512 = vmatpush.msra.mxu0 0.0
        %513 = vmatpush.msra.mxu0 0.0
        %514 = vmatpush.msra.mxu0 0.0
        %515 = vmatpush.msra.mxu0 0.0
        %516 = vmatpush.msra.mxu0 0.0
        %517 = vmatpush.msra.mxu0 0.0
        %518 = vmatpush.msra.mxu0 0.0
        %519 = vmatpush.msra.mxu0 0.0
        %520 = vmatpush.msra.mxu0 0.0
        %521 = vmatpush.msra.mxu0 0.0
        %522 = vmatpush.msra.mxu0 0.0
        %523 = vmatpush.msra.mxu0 0.0
        %524 = vmatpush.msra.mxu0 %v504
        %525 = vmatmul.f32.gmra.mxu0 %v507
        %v526 = vpop.f32.mrf.mxu0
        %v527 = vadd.f32 0.0, %v526
        %528 = vdwg.mxu0
        %v529 = vld [vmem:[#allocation3] sm:$0xff]
        %531 = vset.pattern.permute.xlu0 0
        %532 = vperm.xlu0 %531, %v486
        %v533 = vpop.permute.xlu0 %532
        %v535 = vmul.f32 %v533, %v529
        %v536 = vadd.f32 %v535, %v527
        %537 = vst.msk [vmem:[#allocation3] sm:$0xff] %vm452, %v536
        %538 = vst.msk [vmem:[#allocation4] sm:$0xff] %vm501, %v483
        %v539 = vld [vmem:[#allocation2] sm:$0xff]
        %541 = vrot.lane.b32.xlu0 %v539, 120
        %v542 = vpop.permute.xlu0 %541
        %543 = vrot.lane.b32.xlu0 %v449, 120
        %v544 = vpop.permute.xlu0 %543
        %v545 = vsel %vm452, %v542, 0
        %v547 = vsel %vm452, %v544, 0
        %549 = vmatpush.xpose.msra.mxu0 0.0
        %550 = vmatpush.xpose.msra.mxu0 0.0
        %551 = vmatpush.xpose.msra.mxu0 0.0
        %552 = vmatpush.xpose.msra.mxu0 0.0
        %553 = vmatpush.xpose.msra.mxu0 0.0
        %554 = vmatpush.xpose.msra.mxu0 0.0
        %555 = vmatpush.xpose.msra.mxu0 0.0
        %556 = vmatpush.xpose.msra.mxu0 0.0
        %557 = vmatpush.xpose.msra.mxu0 0.0
        %558 = vmatpush.xpose.msra.mxu0 0.0
        %559 = vmatpush.xpose.msra.mxu0 0.0
        %560 = vmatpush.xpose.msra.mxu0 0.0
        %561 = vmatpush.xpose.msra.mxu0 0.0
        %562 = vmatpush.xpose.msra.mxu0 0.0
        %563 = vmatpush.xpose.msra.mxu0 0.0
        %564 = vmatpush.xpose.msra.mxu0 %v547
        %565 = vmatmul.f32.gmra.mxu0 %v545
        %v566 = vpop.f32.mrf.mxu0
        %v567 = vadd.f32 0.0, %v566
        %568 = vdwg.mxu0
        %v569 = vld [vmem:[#allocation4] sm:$0xff]
        %v570 = vsel %vm452, %v567, -inf
        %571 = vmax.xlane.f32.xlu0 %v570
        %v572 = vpop.xlane.xlu0 %571
        %v573 = vmax.f32 %v569, %v572
        %v574 = vsub.f32 %v569, %v573
        %v575 = vmul.f32 %v574, 1.442695
        %v576 = vpow.pop %v575
        %578 = vset.pattern.permute.xlu0 1
        %579 = vperm.xlu0 %578, %v573
        %v580 = vpop.permute.xlu0 %579
        %v582 = vsub.f32 %v567, %v580
        %v583 = vmul.f32 %v582, 1.442695
        %v584 = vpow.pop %v583
        %v585 = vld [vmem:[#allocation5] sm:$0xff]
        %v586 = vmul.f32 %v576, %v585
        %v587 = vsel %vm452, %v584, 0.0
        %588 = vadd.xlane.f32.xlu0 %v587
        %v589 = vpop.xlane.xlu0 %588
        %v590 = vadd.f32 %v586, %v589
        %vm591 = vcmask 15368
        %592 = vst.msk [vmem:[#allocation5] sm:$0xff] %vm591, %v590
        %593 = vrot.lane.b32.xlu0 %v449, 88
        %v594 = vpop.permute.xlu0 %593
        %v597 = vsel %vm452, %v584, 0
        %599 = vmatpush.msra.mxu0 0.0
        %600 = vmatpush.msra.mxu0 0.0
        %601 = vmatpush.msra.mxu0 0.0
        %602 = vmatpush.msra.mxu0 0.0
        %603 = vmatpush.msra.mxu0 0.0
        %604 = vmatpush.msra.mxu0 0.0
        %605 = vmatpush.msra.mxu0 0.0
        %606 = vmatpush.msra.mxu0 0.0
        %607 = vmatpush.msra.mxu0 0.0
        %608 = vmatpush.msra.mxu0 0.0
        %609 = vmatpush.msra.mxu0 0.0
        %610 = vmatpush.msra.mxu0 0.0
        %611 = vmatpush.msra.mxu0 0.0
        %612 = vmatpush.msra.mxu0 0.0
        %613 = vmatpush.msra.mxu0 0.0
        %614 = vmatpush.msra.mxu0 %v594
        %615 = vmatmul.f32.gmra.mxu0 %v597
        %v616 = vpop.f32.mrf.mxu0
        %v617 = vadd.f32 0.0, %v616
        %618 = vdwg.mxu0
        %v619 = vld [vmem:[#allocation3] sm:$0xff]
        %621 = vset.pattern.permute.xlu0 1
        %622 = vperm.xlu0 %621, %v576
        %v623 = vpop.permute.xlu0 %622
        %v625 = vmul.f32 %v623, %v619
        %627 = vrot.lane.b32.xlu0 %v617, 8
        %v628 = vpop.permute.xlu0 %627
        %v630 = vadd.f32 %v625, %v628
        %vm631 = vcmask 130112
        %632 = vst.msk [vmem:[#allocation3] sm:$0xff] %vm631, %v630
        %633 = vst.msk [vmem:[#allocation4] sm:$0xff] %vm591, %v573
        %v634 = vld [vmem:[#allocation2] sm:$0xff]
        %636 = vrot.lane.b32.xlu0 %v634, 112
        %v637 = vpop.permute.xlu0 %636
        %638 = vrot.lane.b32.xlu0 %v449, 112
        %v639 = vpop.permute.xlu0 %638
        %v640 = vsel %vm452, %v637, 0
        %v642 = vsel %vm452, %v639, 0
        %644 = vmatpush.xpose.msra.mxu0 0.0
        %645 = vmatpush.xpose.msra.mxu0 0.0
        %646 = vmatpush.xpose.msra.mxu0 0.0
        %647 = vmatpush.xpose.msra.mxu0 0.0
        %648 = vmatpush.xpose.msra.mxu0 0.0
        %649 = vmatpush.xpose.msra.mxu0 0.0
        %650 = vmatpush.xpose.msra.mxu0 0.0
        %651 = vmatpush.xpose.msra.mxu0 0.0
        %652 = vmatpush.xpose.msra.mxu0 0.0
        %653 = vmatpush.xpose.msra.mxu0 0.0
        %654 = vmatpush.xpose.msra.mxu0 0.0
        %655 = vmatpush.xpose.msra.mxu0 0.0
        %656 = vmatpush.xpose.msra.mxu0 0.0
        %657 = vmatpush.xpose.msra.mxu0 0.0
        %658 = vmatpush.xpose.msra.mxu0 0.0
        %659 = vmatpush.xpose.msra.mxu0 %v642
        %660 = vmatmul.f32.gmra.mxu0 %v640
        %v661 = vpop.f32.mrf.mxu0
        %v662 = vadd.f32 0.0, %v661
        %663 = vdwg.mxu0
        %v664 = vld [vmem:[#allocation4] sm:$0xff]
        %v665 = vsel %vm452, %v662, -inf
        %666 = vmax.xlane.f32.xlu0 %v665
        %v667 = vpop.xlane.xlu0 %666
        %v668 = vmax.f32 %v664, %v667
        %v669 = vsub.f32 %v664, %v668
        %v670 = vmul.f32 %v669, 1.442695
        %v671 = vpow.pop %v670
        %673 = vset.pattern.permute.xlu0 2
        %674 = vperm.xlu0 %673, %v668
        %v675 = vpop.permute.xlu0 %674
        %v677 = vsub.f32 %v662, %v675
        %v678 = vmul.f32 %v677, 1.442695
        %v679 = vpow.pop %v678
        %v680 = vld [vmem:[#allocation5] sm:$0xff]
        %v681 = vmul.f32 %v671, %v680
        %v682 = vsel %vm452, %v679, 0.0
        %683 = vadd.xlane.f32.xlu0 %v682
        %v684 = vpop.xlane.xlu0 %683
        %v685 = vadd.f32 %v681, %v684
        %vm686 = vcmask 23568
        %687 = vst.msk [vmem:[#allocation5] sm:$0xff] %vm686, %v685
        %688 = vrot.lane.b32.xlu0 %v449, 80
        %v689 = vpop.permute.xlu0 %688
        %v692 = vsel %vm452, %v679, 0
        %694 = vmatpush.msra.mxu0 0.0
        %695 = vmatpush.msra.mxu0 0.0
        %696 = vmatpush.msra.mxu0 0.0
        %697 = vmatpush.msra.mxu0 0.0
        %698 = vmatpush.msra.mxu0 0.0
        %699 = vmatpush.msra.mxu0 0.0
        %700 = vmatpush.msra.mxu0 0.0
        %701 = vmatpush.msra.mxu0 0.0
        %702 = vmatpush.msra.mxu0 0.0
        %703 = vmatpush.msra.mxu0 0.0
        %704 = vmatpush.msra.mxu0 0.0
        %705 = vmatpush.msra.mxu0 0.0
        %706 = vmatpush.msra.mxu0 0.0
        %707 = vmatpush.msra.mxu0 0.0
        %708 = vmatpush.msra.mxu0 0.0
        %709 = vmatpush.msra.mxu0 %v689
        %710 = vmatmul.f32.gmra.mxu0 %v692
        %v711 = vpop.f32.mrf.mxu0
        %v712 = vadd.f32 0.0, %v711
        %713 = vdwg.mxu0
        %v714 = vld [vmem:[#allocation3] sm:$0xff]
        %716 = vset.pattern.permute.xlu0 2
        %717 = vperm.xlu0 %716, %v671
        %v718 = vpop.permute.xlu0 %717
        %v720 = vmul.f32 %v718, %v714
        %722 = vrot.lane.b32.xlu0 %v712, 16
        %v723 = vpop.permute.xlu0 %722
        %v725 = vadd.f32 %v720, %v723
        %vm726 = vcmask 195712
        %727 = vst.msk [vmem:[#allocation3] sm:$0xff] %vm726, %v725
        %728 = vst.msk [vmem:[#allocation4] sm:$0xff] %vm686, %v668
        %v729 = vld [vmem:[#allocation2] sm:$0xff]
        %731 = vrot.lane.b32.xlu0 %v729, 104
        %v732 = vpop.permute.xlu0 %731
        %733 = vrot.lane.b32.xlu0 %v449, 104
        %v734 = vpop.permute.xlu0 %733
        %v735 = vsel %vm452, %v732, 0
        %v737 = vsel %vm452, %v734, 0
        %739 = vmatpush.xpose.msra.mxu0 0.0
        %740 = vmatpush.xpose.msra.mxu0 0.0
        %741 = vmatpush.xpose.msra.mxu0 0.0
        %742 = vmatpush.xpose.msra.mxu0 0.0
        %743 = vmatpush.xpose.msra.mxu0 0.0
        %744 = vmatpush.xpose.msra.mxu0 0.0
        %745 = vmatpush.xpose.msra.mxu0 0.0
        %746 = vmatpush.xpose.msra.mxu0 0.0
        %747 = vmatpush.xpose.msra.mxu0 0.0
        %748 = vmatpush.xpose.msra.mxu0 0.0
        %749 = vmatpush.xpose.msra.mxu0 0.0
        %750 = vmatpush.xpose.msra.mxu0 0.0
        %751 = vmatpush.xpose.msra.mxu0 0.0
        %752 = vmatpush.xpose.msra.mxu0 0.0
        %753 = vmatpush.xpose.msra.mxu0 0.0
        %754 = vmatpush.xpose.msra.mxu0 %v737
        %755 = vmatmul.f32.gmra.mxu0 %v735
        %v756 = vpop.f32.mrf.mxu0
        %v757 = vadd.f32 0.0, %v756
        %758 = vdwg.mxu0
        %v759 = vld [vmem:[#allocation4] sm:$0xff]
        %v760 = vsel %vm452, %v757, -inf
        %761 = vmax.xlane.f32.xlu0 %v760
        %v762 = vpop.xlane.xlu0 %761
        %v763 = vmax.f32 %v759, %v762
        %v764 = vsub.f32 %v759, %v763
        %v765 = vmul.f32 %v764, 1.442695
        %v766 = vpow.pop %v765
        %768 = vset.pattern.permute.xlu0 3
        %769 = vperm.xlu0 %768, %v763
        %v770 = vpop.permute.xlu0 %769
        %v772 = vsub.f32 %v757, %v770
        %v773 = vmul.f32 %v772, 1.442695
        %v774 = vpow.pop %v773
        %v775 = vld [vmem:[#allocation5] sm:$0xff]
        %v776 = vmul.f32 %v766, %v775
        %v777 = vsel %vm452, %v774, 0.0
        %778 = vadd.xlane.f32.xlu0 %v777
        %v779 = vpop.xlane.xlu0 %778
        %v780 = vadd.f32 %v776, %v779
        %vm781 = vcmask 31768
        %782 = vst.msk [vmem:[#allocation5] sm:$0xff] %vm781, %v780
        %783 = vrot.lane.b32.xlu0 %v449, 72
        %v784 = vpop.permute.xlu0 %783
        %v787 = vsel %vm452, %v774, 0
        %789 = vmatpush.msra.mxu0 0.0
        %790 = vmatpush.msra.mxu0 0.0
        %791 = vmatpush.msra.mxu0 0.0
        %792 = vmatpush.msra.mxu0 0.0
        %793 = vmatpush.msra.mxu0 0.0
        %794 = vmatpush.msra.mxu0 0.0
        %795 = vmatpush.msra.mxu0 0.0
        %796 = vmatpush.msra.mxu0 0.0
        %797 = vmatpush.msra.mxu0 0.0
        %798 = vmatpush.msra.mxu0 0.0
        %799 = vmatpush.msra.mxu0 0.0
        %800 = vmatpush.msra.mxu0 0.0
        %801 = vmatpush.msra.mxu0 0.0
        %802 = vmatpush.msra.mxu0 0.0
        %803 = vmatpush.msra.mxu0 0.0
        %804 = vmatpush.msra.mxu0 %v784
        %805 = vmatmul.f32.gmra.mxu0 %v787
        %v806 = vpop.f32.mrf.mxu0
        %v807 = vadd.f32 0.0, %v806
        %808 = vdwg.mxu0
        %v809 = vld [vmem:[#allocation3] sm:$0xff]
        %811 = vset.pattern.permute.xlu0 3
        %812 = vperm.xlu0 %811, %v766
        %v813 = vpop.permute.xlu0 %812
        %v815 = vmul.f32 %v813, %v809
        %817 = vrot.lane.b32.xlu0 %v807, 24
        %v818 = vpop.permute.xlu0 %817
        %v820 = vadd.f32 %v815, %v818
        %vm821 = vcmask 261312
        %822 = vst.msk [vmem:[#allocation3] sm:$0xff] %vm821, %v820
        %823 = vst.msk [vmem:[#allocation4] sm:$0xff] %vm781, %v763
        // Predicated region
        $region69: #{tpu_custom_call.1} parent=43 // pred_check
          %p824 = pneg %p384
        $region70: #{tpu_custom_call.1} parent=43 // pred_check_branch
          %826 = sbr.rel (%p824) target = $region72
        $region71: #{tpu_custom_call.1} parent=43 // pred_region
          %v827 = vld [vmem:[#allocation5] sm:$0xff]
          %v828 = vrcp.pop %v827
          %v829 = vld [vmem:[#allocation3] sm:$0xff]
          %831 = vset.pattern.permute.xlu0 0
          %832 = vperm.xlu0 %831, %v828
          %v833 = vpop.permute.xlu0 %832
          %v835 = vmul.f32 %v829, %v833
          %836 = vst.msk [vmem:[#allocation3] sm:$0xff] %vm452, %v835
          %v837 = vld [vmem:[#allocation3] sm:$0xff]
          %838 = vset.pattern.permute.xlu0 1
          %839 = vperm.xlu0 %838, %v828
          %v840 = vpop.permute.xlu0 %839
          %v842 = vmul.f32 %v837, %v840
          %843 = vst.msk [vmem:[#allocation3] sm:$0xff] %vm631, %v842
          %v844 = vld [vmem:[#allocation3] sm:$0xff]
          %845 = vset.pattern.permute.xlu0 2
          %846 = vperm.xlu0 %845, %v828
          %v847 = vpop.permute.xlu0 %846
          %v849 = vmul.f32 %v844, %v847
          %850 = vst.msk [vmem:[#allocation3] sm:$0xff] %vm726, %v849
          %v851 = vld [vmem:[#allocation3] sm:$0xff]
          %852 = vset.pattern.permute.xlu0 3
          %853 = vperm.xlu0 %852, %v828
          %v854 = vpop.permute.xlu0 %853
          %v856 = vmul.f32 %v851, %v854
          %857 = vst.msk [vmem:[#allocation3] sm:$0xff] %vm821, %v856
          %v858 = vld [vmem:[#allocation3] sm:$0xff]
          %v859 = vld [vmem:[#allocation14] sm:$0xff]
          %v860 = vld [vmem:[#allocation14 + $0x8] sm:$0xff]
          %v861 = vld [vmem:[#allocation14 + $0x10] sm:$0xff]
          %v862 = vld [vmem:[#allocation14 + $0x18] sm:$0xff]
          %v863 = vld [vmem:[%s5] sm:$0x1]
          %v865 = vperm.slane %v863, 0
          %v868 = vsel %vm427, %v858, 0
          %870 = vmatpush.msra.mxu0 0.0
          %871 = vmatpush.msra.mxu0 0.0
          %872 = vmatpush.msra.mxu0 0.0
          %873 = vmatpush.msra.mxu0 0.0
          %874 = vmatpush.msra.mxu0 0.0
          %875 = vmatpush.msra.mxu0 0.0
          %876 = vmatpush.msra.mxu0 0.0
          %877 = vmatpush.msra.mxu0 0.0
          %878 = vmatpush.msra.mxu0 0.0
          %879 = vmatpush.msra.mxu0 0.0
          %880 = vmatpush.msra.mxu0 0.0
          %881 = vmatpush.msra.mxu0 0.0
          %882 = vmatpush.msra.mxu0 %v862
          %883 = vmatpush.msra.mxu0 %v861
          %884 = vmatpush.msra.mxu0 %v860
          %885 = vmatpush.msra.mxu0 %v859
          %886 = vmatmul.f32.gmra.mxu0 %v868
          %v887 = vpop.f32.mrf.mxu0
          %v888 = vadd.f32 %v865, %v887
          %889 = vdwg.mxu0
          %890 = vst.msk [vmem:[%s383] sm:$0xff] %vm427, %v888
        $region72: #{tpu_custom_call.1} parent=43 // pred_fallthru
          _
        %s891 = sand.u32 %s196, 1
        %s892 = scalar_lea.sflag [#allocation8], %s891
        %s893 = sand.u32 %s196, 1
        %s894 = smul.addr %s893, 8
        %s895 = scalar_lea.vmem [#allocation15], %s894
        // Predicated region
        $region73: #{tpu_custom_call.1} parent=43 // pred_check
          %p896 = pneg %p206
        $region74: #{tpu_custom_call.1} parent=43 // pred_check_branch
          %898 = sbr.rel (%p896) target = $region76
        $region75: #{tpu_custom_call.1} parent=43 // pred_region
          %900 = vsyncadd %s892, 0
          %s901 = sadd.s32 %s33, %s32
          %s902 = smul.addr %s901, 8
          %s903 = scalar_lea.hbm %s6, %s902
          %s905 = sshll.u32 %s895, 4
          %s906 = int_to_ptr.vmem [resolvable:$true] %s905
          %s907 = sshll.u32 %s903, 4
          %s908 = int_to_ptr.hbm [resolvable:$true] %s907
          %910 = dma.vmem_to_hbm [thread:$0]  %s906, 128, %s908, %s892
        $region76: #{tpu_custom_call.1} parent=43 // pred_fallthru
          _
      $region44: #{tpu_custom_call.1} parent=5 // pred_fallthru
        _
      %p911 = scmp.le.s32.totalorder 2, %s22
      // Predicated region
      $region77: #{tpu_custom_call.1} parent=5 // pred_check
        %p912 = pneg %p911
      $region78: #{tpu_custom_call.1} parent=5 // pred_check_branch
        %914 = sbr.rel (%p912) target = $region80
      $region79: #{tpu_custom_call.1} parent=5 // pred_region
        %s915 = ssub.s32 %s22, 2
        // Predicated region
        $region81: #{tpu_custom_call.1} parent=79 // pred_check
          %p916 = pneg %p212
        $region82: #{tpu_custom_call.1} parent=79 // pred_check_branch
          %918 = sbr.rel (%p916) target = $region84
        $region83: #{tpu_custom_call.1} parent=79 // pred_region
          %s919 = sand.u32 %s197, 1
          %s920 = scalar_lea.sflag [#allocation8], %s919
          %s921 = sand.u32 %s197, 1
          %s922 = smul.addr %s921, 8
          %s923 = scalar_lea.vmem [#allocation15], %s922
          %925 = dma.done %s920, 128
        $region84: #{tpu_custom_call.1} parent=79 // pred_fallthru
          _
      $region80: #{tpu_custom_call.1} parent=5 // pred_fallthru
        _
    $region6: #{tpu_custom_call.1} parent=1 // loop_footer
      %s26 = sadd.s32 1, %s22
    $region7: #{tpu_custom_call.1} parent=1 // loop_footer_branch
      %21 = sbr.rel target = $region3
    $region8: #{tpu_custom_call.1} parent=1 // loop_exit
      _
    %926 = vsyncpa [#allocation7], 1
    %s927 = scalar_lea.sflag [#allocation7], 1
    %928 = vsyncpa %s927, 1
    %929 = vsyncpa [#allocation10], 1
    %s930 = scalar_lea.sflag [#allocation10], 1
    %931 = vsyncpa %s930, 1
    %932 = vsyncpa [#allocation13], 1
    %933 = vsyncpa [#allocation8], 1
    %s934 = scalar_lea.sflag [#allocation8], 1
    %935 = vsyncpa %s934, 1

</llo_original>
